<compile_context>
chip_gen: v7x
topology: tpu7x:2x2x1
jax: 0.10.0
libtpu: 0.0.40
codegen_flags: <defaults>
</compile_context>

<pallas_src>
import functools

import numpy as np
import jax
import jax.numpy as jnp
from jax import lax
from jax.experimental import pallas as pl
from jax.experimental.pallas import tpu as pltpu


_LANES = 128
_MAX_TILE_ROWS = 2048  # 2048 x 128 x 4 B = 1 MiB per output tile


def _to_i32(x):
    """Reinterpret a 32-bit unsigned constant as a signed int32 Python int."""
    x &= 0xFFFFFFFF
    return x - (1 << 32) if x & 0x80000000 else x


_GOLD = _to_i32(0x9E3779B9)   # splitmix golden-ratio increment
_MIX1 = _to_i32(0x85EBCA6B)   # murmur3 / splitmix32 finalizer constants
_MIX2 = _to_i32(0xC2B2AE35)


def _fmix32(x):
    """Murmur3/splitmix32 avalanche finalizer on int32 (wrapping arithmetic)."""
    x = x ^ lax.shift_right_logical(x, 16)
    x = x * jnp.int32(_MIX1)
    x = x ^ lax.shift_right_logical(x, 13)
    x = x * jnp.int32(_MIX2)
    x = x ^ lax.shift_right_logical(x, 16)
    return x


def _randn_kernel(seed_ref, out_ref):
    """Fill the (tile_rows, 128) output tile with N(0,1) samples.

    Counter-based PRNG: each element's value is a pure function of its global
    flat index and the seed, so tiling / megacore sharding never duplicates
    sample streams.
    """
    tile_rows, lanes = out_ref.shape
    row0 = pl.program_id(0) * tile_rows
    row = lax.broadcasted_iota(jnp.int32, (tile_rows, lanes), 0) + row0
    col = lax.broadcasted_iota(jnp.int32, (tile_rows, lanes), 1)
    idx = row * lanes + col

    seed = seed_ref[0]
    # splitmix32: two counter states per element, finalized independently.
    state = seed + (idx * 2) * jnp.int32(_GOLD)
    b1 = _fmix32(state)
    b2 = _fmix32(state + jnp.int32(_GOLD))

    # Top 24 bits -> uniforms; u1 in (0, 1] (safe for log), u2 in [0, 1).
    inv24 = 1.0 / 16777216.0
    u1 = (lax.shift_right_logical(b1, 8).astype(jnp.float32) + 1.0) * inv24
    u2 = lax.shift_right_logical(b2, 8).astype(jnp.float32) * inv24

    # Box-Muller transform (EUP: log/sqrt/cos; VPU: muls) in f32, cast at store.
    r = jnp.sqrt(-2.0 * jnp.log(u1))
    theta = jnp.float32(2.0 * np.pi) * u2
    out_ref[...] = (r * jnp.cos(theta)).astype(out_ref.dtype)


@functools.partial(jax.jit, static_argnums=(1, 2, 3))
def _draw_standard_normal(seed_arr, batch_size, n_x, dtype):
    n = batch_size * n_x
    # Lane-dense slab: pad the flat element count up to full (16, 128) tiles.
    rows = -(-max(n, 1) // _LANES)
    rows = max(16, -(-rows // 16) * 16)
    if rows <= _MAX_TILE_ROWS:
        tile_rows = rows
    else:
        tile_rows = _MAX_TILE_ROWS
        rows = -(-rows // tile_rows) * tile_rows
    grid = (rows // tile_rows,)

    slab = pl.pallas_call(
        _randn_kernel,
        out_shape=jax.ShapeDtypeStruct((rows, _LANES), dtype),
        grid=grid,
        in_specs=[pl.BlockSpec(memory_space=pltpu.MemorySpace.SMEM)],
        out_specs=pl.BlockSpec((tile_rows, _LANES), lambda i: (i, 0)),
        compiler_params=pltpu.CompilerParams(
            dimension_semantics=("parallel",)),
    )(seed_arr)

    # Row-major reshape + slice back to the module's (batch, n_x) shape
    # (outside the kernel; negligible vs. the kernel's HBM traffic).
    return slab.reshape(-1)[:n].reshape(batch_size, n_x)


def random_state_estimator(u, y, n_x, *, seed=0, batch_first=False):
    """Pallas equivalent of RandomStateEstimator.forward(u, y).

    u: (T, B, n_u) if batch_first=False else (B, T, n_u)
    y: same layout with n_y features (unused; kept for API parity)
    Returns x_est of shape (B, n_x) with dtype == u.dtype.
    """
    del y  # forward() never reads y
    dim_batch = 0 if batch_first else 1
    batch_size = int(u.shape[dim_batch])
    seed_arr = jnp.asarray(seed, dtype=jnp.int32).reshape((1,))
    return _draw_standard_normal(seed_arr, batch_size, int(n_x), u.dtype)


if __name__ == "__main__":
    # Small shapes consistent with the module's forward (time-major layout).
    T, B = 8, 8
    n_u, n_y, n_x = 2, 3, 4

    key = jax.random.PRNGKey(0)
    ku, ky = jax.random.split(key)
    u = jax.random.normal(ku, (T, B, n_u), dtype=jnp.float32)
    y = jax.random.normal(ky, (T, B, n_y), dtype=jnp.float32)

    x_est = jax.block_until_ready(random_state_estimator(u, y, n_x, seed=0))

    # Shape / dtype semantics of the PyTorch forward.
    assert x_est.shape == (B, n_x), x_est.shape
    assert x_est.dtype == jnp.float32, x_est.dtype
    xh = np.asarray(x_est)
    assert np.all(np.isfinite(xh))
    assert xh.std() > 0.0  # not a constant fill

    # Deterministic w.r.t. the explicit seed.
    x_est2 = jax.block_until_ready(random_state_estimator(u, y, n_x, seed=0))
    np.testing.assert_array_equal(np.asarray(x_est2), xh)

    # Loose distribution check on a larger batch: samples ~ N(0, 1).
    B_big = 2048
    u_big = jnp.zeros((T, B_big, n_u), dtype=jnp.float32)
    y_big = jnp.zeros((T, B_big, n_y), dtype=jnp.float32)
    x_big = np.asarray(jax.block_until_ready(
        random_state_estimator(u_big, y_big, n_x, seed=1234)))
    assert x_big.shape == (B_big, n_x)
    assert abs(float(x_big.mean())) < 0.1, float(x_big.mean())
    assert 0.85 < float(x_big.std()) < 1.15, float(x_big.std())

    # TODO(synk): torch.randn's exact global-RNG bit stream (and its implicit
    # global-state advance across calls) cannot be reproduced; an explicit
    # seed with a counter-based in-kernel PRNG preserves shape/dtype and the
    # N(0,1) distribution instead.
    print("KERNEL_OK")
</pallas_src>

<mosaic_0001>
module attributes {stable_mosaic.version = 11 : i64} {
  func.func @_randn_kernel(%arg0: i32, %arg1: memref<1xi32, #tpu.memory_space<smem>>, %arg2: memref<16x128xf32, #tpu.memory_space<vmem>>) attributes {dimension_semantics = [#tpu.dimension_semantics<parallel>], iteration_bounds = array<i64: 1>, scalar_prefetch = 0 : i64, scratch_operands = 0 : i64, tpu.core_type = #tpu.core_type<tc>, window_params = [{transform_indices = @transform_0, window_bounds = array<i64: 1>}, {transform_indices = @transform_1, window_bounds = array<i64: 16, 128>}]} {
    %c16_i32 = arith.constant 16 : i32
    %0 = arith.muli %arg0, %c16_i32 : i32
    %1 = tpu.iota {dimensions = array<i32: 0>} : vector<16x128xi32>
    %2 = vector.broadcast %0 : i32 to vector<16x128xi32>
    %3 = arith.addi %1, %2 : vector<16x128xi32>
    %4 = tpu.iota {dimensions = array<i32: 1>} : vector<16x128xi32>
    %c128_i32 = arith.constant 128 : i32
    %5 = vector.broadcast %c128_i32 : i32 to vector<16x128xi32>
    %6 = arith.muli %3, %5 : vector<16x128xi32>
    %7 = arith.addi %6, %4 : vector<16x128xi32>
    %c0 = arith.constant 0 : index
    %8 = memref.load %arg1[%c0] : memref<1xi32, #tpu.memory_space<smem>>
    %c2_i32 = arith.constant 2 : i32
    %9 = vector.broadcast %c2_i32 : i32 to vector<16x128xi32>
    %10 = arith.muli %7, %9 : vector<16x128xi32>
    %c-1640531527_i32 = arith.constant -1640531527 : i32
    %11 = vector.broadcast %c-1640531527_i32 : i32 to vector<16x128xi32>
    %12 = arith.muli %10, %11 : vector<16x128xi32>
    %13 = vector.broadcast %8 : i32 to vector<16x128xi32>
    %14 = arith.addi %13, %12 : vector<16x128xi32>
    %c16_i32_0 = arith.constant 16 : i32
    %15 = vector.broadcast %c16_i32_0 : i32 to vector<16x128xi32>
    %16 = arith.shrui %14, %15 : vector<16x128xi32>
    %17 = arith.xori %14, %16 : vector<16x128xi32>
    %c-2048144789_i32 = arith.constant -2048144789 : i32
    %18 = vector.broadcast %c-2048144789_i32 : i32 to vector<16x128xi32>
    %19 = arith.muli %17, %18 : vector<16x128xi32>
    %c13_i32 = arith.constant 13 : i32
    %20 = vector.broadcast %c13_i32 : i32 to vector<16x128xi32>
    %21 = arith.shrui %19, %20 : vector<16x128xi32>
    %22 = arith.xori %19, %21 : vector<16x128xi32>
    %c-1028477387_i32 = arith.constant -1028477387 : i32
    %23 = vector.broadcast %c-1028477387_i32 : i32 to vector<16x128xi32>
    %24 = arith.muli %22, %23 : vector<16x128xi32>
    %c16_i32_1 = arith.constant 16 : i32
    %25 = vector.broadcast %c16_i32_1 : i32 to vector<16x128xi32>
    %26 = arith.shrui %24, %25 : vector<16x128xi32>
    %27 = arith.xori %24, %26 : vector<16x128xi32>
    %c-1640531527_i32_2 = arith.constant -1640531527 : i32
    %28 = vector.broadcast %c-1640531527_i32_2 : i32 to vector<16x128xi32>
    %29 = arith.addi %14, %28 : vector<16x128xi32>
    %c16_i32_3 = arith.constant 16 : i32
    %30 = vector.broadcast %c16_i32_3 : i32 to vector<16x128xi32>
    %31 = arith.shrui %29, %30 : vector<16x128xi32>
    %32 = arith.xori %29, %31 : vector<16x128xi32>
    %c-2048144789_i32_4 = arith.constant -2048144789 : i32
    %33 = vector.broadcast %c-2048144789_i32_4 : i32 to vector<16x128xi32>
    %34 = arith.muli %32, %33 : vector<16x128xi32>
    %c13_i32_5 = arith.constant 13 : i32
    %35 = vector.broadcast %c13_i32_5 : i32 to vector<16x128xi32>
    %36 = arith.shrui %34, %35 : vector<16x128xi32>
    %37 = arith.xori %34, %36 : vector<16x128xi32>
    %c-1028477387_i32_6 = arith.constant -1028477387 : i32
    %38 = vector.broadcast %c-1028477387_i32_6 : i32 to vector<16x128xi32>
    %39 = arith.muli %37, %38 : vector<16x128xi32>
    %c16_i32_7 = arith.constant 16 : i32
    %40 = vector.broadcast %c16_i32_7 : i32 to vector<16x128xi32>
    %41 = arith.shrui %39, %40 : vector<16x128xi32>
    %42 = arith.xori %39, %41 : vector<16x128xi32>
    %c8_i32 = arith.constant 8 : i32
    %43 = vector.broadcast %c8_i32 : i32 to vector<16x128xi32>
    %44 = arith.shrui %27, %43 : vector<16x128xi32>
    %45 = arith.sitofp %44 : vector<16x128xi32> to vector<16x128xf32>
    %cst = arith.constant 1.000000e+00 : f32
    %46 = vector.broadcast %cst : f32 to vector<16x128xf32>
    %47 = arith.addf %45, %46 : vector<16x128xf32>
    %cst_8 = arith.constant 5.96046448E-8 : f32
    %48 = vector.broadcast %cst_8 : f32 to vector<16x128xf32>
    %49 = arith.mulf %47, %48 : vector<16x128xf32>
    %c8_i32_9 = arith.constant 8 : i32
    %50 = vector.broadcast %c8_i32_9 : i32 to vector<16x128xi32>
    %51 = arith.shrui %42, %50 : vector<16x128xi32>
    %52 = arith.sitofp %51 : vector<16x128xi32> to vector<16x128xf32>
    %cst_10 = arith.constant 5.96046448E-8 : f32
    %53 = vector.broadcast %cst_10 : f32 to vector<16x128xf32>
    %54 = arith.mulf %52, %53 : vector<16x128xf32>
    %55 = math.log %49 : vector<16x128xf32>
    %cst_11 = arith.constant -2.000000e+00 : f32
    %56 = vector.broadcast %cst_11 : f32 to vector<16x128xf32>
    %57 = arith.mulf %56, %55 : vector<16x128xf32>
    %58 = math.sqrt %57 : vector<16x128xf32>
    %cst_12 = arith.constant 6.28318548 : f32
    %59 = vector.broadcast %cst_12 : f32 to vector<16x128xf32>
    %60 = arith.mulf %59, %54 : vector<16x128xf32>
    %61 = math.cos %60 : vector<16x128xf32>
    %62 = arith.mulf %58, %61 : vector<16x128xf32>
    %c0_13 = arith.constant 0 : index
    %c0_14 = arith.constant 0 : index
    %63 = vector.load %arg2[%c0_13, %c0_14] : memref<16x128xf32, #tpu.memory_space<vmem>>, vector<16x128xf32>
    tpu.vector_store %arg2[%c0_13, %c0_14], %62 {strides = array<i32>} : memref<16x128xf32, #tpu.memory_space<vmem>>, vector<16x128xf32>,
    return
  }
  func.func @transform_0(%arg0: i32) -> i32 {
    %c0_i32 = arith.constant 0 : i32
    %c0_i32_0 = arith.constant 0 : i32
    return %c0_i32 : i32
  }
  func.func @transform_1(%arg0: i32) -> (i32, i32) {
    %c0_i32 = arith.constant 0 : i32
    %c0_i32_0 = arith.constant 0 : i32
    return %arg0, %c0_i32 : i32, i32
  }
}

</mosaic_0001>

<llo_original>
// kernel: _draw_standard_normal.1
$region0: #{_draw_standard_normal.1}
  #allocation0 [shape = 'u32[]', space=smem, size = 0x4, offset = 0x4, fixed_abs, tag = 'smem constant byte address 0x4 - core index']
  #allocation1 [shape = 'u32[144,128]{1,0:T(1,128)}', space=vmem, size = 0x12000, scoped, tag = 'internal scratch']
  #allocation2 [shape = 's32[1]{0:T(128)S(6)}', space=smem, size = 0x200, scoped, tag = 'scoped memory for _draw_standard_normal.1']
  %s0 = inlined_call_operand.<no memory space> [shape: s32[1], index: 0, kind: input, shape index: {}]
  %s1 = inlined_call_operand.vmem [shape: f32[16,128], index: 1, kind: output, shape index: {}]
  %s2 = sld [smem:[#allocation0]]
  $region14: #{_draw_standard_normal.1} parent=0
    _
  %s4 = ssub.s32 1, %s2
  %s5 = scalar_select 0, %s4, %s2
  %6 = sst [smem:[#allocation2]] %s0
  // Predicated region
  $region2: #{_draw_standard_normal.1} parent=0 // pred_check
    _
  $region3: #{_draw_standard_normal.1} parent=0 // pred_check_branch
    %8 = sbr.rel (0) target = $region5
  $region4: #{_draw_standard_normal.1} parent=0 // pred_region
    _
  $region5: #{_draw_standard_normal.1} parent=0 // pred_fallthru
    _
  %s9 = smul.u32 0, 16
  %v10 = vlaneseq
  %v11 = vshrl.u32 %v10, 7
  %v12 = vadd.s32 %v11, 8
  %v13 = vstv %s9
  %v14 = vadd.s32 %v11, %v13
  %v15 = vadd.s32 %v12, %v13
  %v16 = vlaneseq
  %v17 = vand.u32 %v16, 127
  %v18 = vmul.u32 %v14, 128
  %v19 = vmul.u32 %v15, 128
  %v20 = vadd.s32 %v18, %v17
  %v21 = vadd.s32 %v19, %v17
  %s22 = sld [smem:[#allocation2]]
  %v23 = vmul.u32 %v20, 2
  %v24 = vmul.u32 %v21, 2
  %v25 = vmul.u32 %v23, 2654435769
  %v26 = vmul.u32 %v24, 2654435769
  %v27 = vstv %s22
  %v28 = vadd.s32 %v27, %v25
  %v29 = vadd.s32 %v27, %v26
  %v30 = vshrl.u32 %v28, 16
  %v31 = vshrl.u32 %v29, 16
  %v32 = vxor.u32 %v28, %v30
  %v33 = vxor.u32 %v29, %v31
  %v34 = vmul.u32 %v32, 2246822507
  %v35 = vmul.u32 %v33, 2246822507
  %v36 = vshrl.u32 %v34, 13
  %v37 = vshrl.u32 %v35, 13
  %v38 = vxor.u32 %v34, %v36
  %v39 = vxor.u32 %v35, %v37
  %v40 = vmul.u32 %v38, 3266489909
  %v41 = vmul.u32 %v39, 3266489909
  %v42 = vshrl.u32 %v40, 16
  %v43 = vshrl.u32 %v41, 16
  %v44 = vxor.u32 %v40, %v42
  %v45 = vxor.u32 %v41, %v43
  %v46 = vadd.s32 %v28, 2654435769
  %v47 = vadd.s32 %v29, 2654435769
  %v48 = vshrl.u32 %v46, 16
  %v49 = vshrl.u32 %v47, 16
  %v50 = vxor.u32 %v46, %v48
  %v51 = vxor.u32 %v47, %v49
  %v52 = vmul.u32 %v50, 2246822507
  %v53 = vmul.u32 %v51, 2246822507
  %v54 = vshrl.u32 %v52, 13
  %v55 = vshrl.u32 %v53, 13
  %v56 = vxor.u32 %v52, %v54
  %v57 = vxor.u32 %v53, %v55
  %v58 = vmul.u32 %v56, 3266489909
  %v59 = vmul.u32 %v57, 3266489909
  %v60 = vshrl.u32 %v58, 16
  %v61 = vshrl.u32 %v59, 16
  %v62 = vxor.u32 %v58, %v60
  %v63 = vxor.u32 %v59, %v61
  %v64 = vshrl.u32 %v44, 8
  %v65 = vshrl.u32 %v45, 8
  %v66 = vcvt.s32.f32 %v64
  %v67 = vcvt.s32.f32 %v65
  %v68 = vadd.f32 %v66, 1.0
  %v69 = vadd.f32 %v67, 1.0
  %v70 = vmul.f32 %v68, 5.9604645e-08
  %v71 = vmul.f32 %v69, 5.9604645e-08
  %v72 = vshrl.u32 %v62, 8
  %v73 = vshrl.u32 %v63, 8
  %v74 = vcvt.s32.f32 %v72
  %v75 = vcvt.s32.f32 %v73
  %v76 = vmul.f32 %v74, 5.9604645e-08
  %v77 = vmul.f32 %v75, 5.9604645e-08
  %v78 = vlog2.pop %v70
  %v79 = vmul.f32 %v78, 0.6931472
  %v80 = vlog2.pop %v71
  %v81 = vmul.f32 %v80, 0.6931472
  %v82 = vmul.f32 %v79, -2.0
  %v83 = vmul.f32 %v81, -2.0
  %v84 = vrsqrt.pop %v82
  %v85 = vmul.f32 %v82, %v84
  %vm86 = vcmp.eq.f32.partialorder %v82, inf
  %v87 = vsel %vm86, %v82, %v85
  %vm88 = vcmp.eq.f32.partialorder %v82, 0.0
  %v89 = vand.u32 %v82, 2147483648
  %v90 = vsel %vm88, %v89, %v87
  %v91 = vrsqrt.pop %v83
  %v92 = vmul.f32 %v83, %v91
  %vm93 = vcmp.eq.f32.partialorder %v83, inf
  %v94 = vsel %vm93, %v83, %v92
  %vm95 = vcmp.eq.f32.partialorder %v83, 0.0
  %v96 = vand.u32 %v83, 2147483648
  %v97 = vsel %vm95, %v96, %v94
  %v98 = vmul.f32 %v76, 6.2831855
  %v99 = vmul.f32 %v77, 6.2831855
  %v100 = vand.u32 2147483647, %v98
  %vm101 = vcmp.le.f32.partialorder %v100, 0.7853982
  %vm102 = vcmp.lt.s32.totalorder %v98, 0
  %v103 = vand.u32 %v98, 2139095040
  %v104 = vshrl.u32 %v103, 23
  %v105 = vsub.s32 %v104, 127
  %v106 = vand.u32 2147483647, %v98
  %v107 = vand.u32 %v106, 8388607
  %v108 = vor.u32 %v107, 8388608
  %v109 = vsub.s32 0, %v108
  %v110 = vadd.s32 %v105, 1
  %vm111 = vcmp.gt.s32.totalorder %v110, 0
  %v112 = vsel %vm111, %v110, 0
  %v113 = vshrl.u32 %v112, 5
  %v114 = vand.u32 %v112, 31
  %v115 = vsub.s32 32, %v114
  %v116 = vshrl.u32 683565275, %v115
  %v117 = vshll.u32 683565275, %v114
  %v118 = vshrl.u32 2475754826, %v115
  %v119 = vor.u32 %v117, %v118
  %v120 = vshll.u32 2475754826, %v114
  %v121 = vshrl.u32 2131351028, %v115
  %v122 = vor.u32 %v120, %v121
  %v123 = vshll.u32 2131351028, %v114
  %v124 = vshrl.u32 2102212464, %v115
  %v125 = vor.u32 %v123, %v124
  %v126 = vshll.u32 2102212464, %v114
  %v127 = vshrl.u32 920167782, %v115
  %v128 = vor.u32 %v126, %v127
  %v129 = vshll.u32 920167782, %v114
  %v130 = vshrl.u32 1326507024, %v115
  %v131 = vor.u32 %v129, %v130
  %vm132 = vcmp.lt.s32.totalorder %v113, 1
  %vm133 = vcmp.lt.s32.totalorder %v113, 2
  %vm134 = vcmp.lt.s32.totalorder %v113, 3
  %vm135 = vcmp.lt.s32.totalorder %v113, 4
  %v136 = vsel %vm132, %v116, %v119
  %v137 = vsel %vm135, %v125, 2102212464
  %v138 = vsel %vm134, %v122, %v137
  %v139 = vsel %vm133, %v136, %v138
  %v140 = vsel %vm132, %v119, %v122
  %v141 = vsel %vm135, %v128, 920167782
  %v142 = vsel %vm134, %v125, %v141
  %v143 = vsel %vm133, %v140, %v142
  %v144 = vsel %vm132, %v122, %v125
  %v145 = vsel %vm135, %v131, 1326507024
  %v146 = vsel %vm134, %v128, %v145
  %v147 = vsel %vm133, %v144, %v146
  %v148 = vshll.u32 %v108, 8
  %v149 = vmul.u32.u64.compose %v148, %v147
  %v150 = vextract.low.u32 %v149
  %v151 = vextract.high.u32 %v149
  %v152 = vmul.u32.u64.compose %v148, %v143
  %v153 = vextract.low.u32 %v152
  %v154 = vextract.high.u32 %v152
  %v155 = vmul.u32 %v148, %v139
  %v156 = vadd.s32 %v151, %v153
  %vm157 = vc.u32 %v151, %v153
  %v158 = vadd.s32 %v154, 1
  %v159 = vsel %vm157, %v158, %v154
  %v160 = vadd.s32 %v155, %v159
  %v161 = vadd.s32 %v160, 536870912
  %v162 = vshrl.u32 %v161, 30
  %v163 = vshll.u32 %v162, 30
  %v164 = vsub.s32 %v160, %v163
  %vm165 = vcmp.lt.s32.totalorder %v164, 0
  %v166 = vsub.s32 0, %v164
  %v167 = vsel %vm165, %v166, %v164
  %v168 = vclz %v167
  %v169 = vsub.s32 %v168, 2
  %vm170 = vcmp.gt.s32.totalorder 0, %v169
  %v171 = vsel %vm170, 0, %v169
  %v172 = vsub.s32 32, %v171
  %v173 = vshll.u32 %v164, %v171
  %v174 = vshrl.u32 %v156, %v172
  %v175 = vor.u32 %v173, %v174
  %v176 = vsub.s32 4294967266, %v171
  %v177 = vadd.s32 %v176, 127
  %v178 = vshll.u32 %v177, 23
  %v179 = vor.u32 4788187, %v178
  %v180 = vand.u32 2147483647, %v179
  %v182 = vcvt.s32.f32 %v175
  %v183 = vmul.f32 %v182, %v180
  %v184 = vxor.u32 %v183, 2147483648
  %v185 = vsel %vm102, %v184, %v183
  %v186 = vsub.s32 4, %v162
  %v187 = vsel %vm102, %v186, %v162
  %v188 = vsel %vm101, %v98, %v185
  %v189 = vsel %vm101, 0, %v187
  %v190 = vcosq.f32.pop %v188
  %v191 = vsinq.f32.pop %v188
  %vm192 = vweird.f32 %v98
  %v193 = vand.u32 %v189, 3
  %vm194 = vcmp.lt.s32.totalorder %v193, 2
  %vm195 = vcmp.eq.s32.totalorder %v193, 0
  %v196 = vxor.u32 %v191, 2147483648
  %v197 = vsel %vm195, %v190, %v196
  %vm198 = vcmp.eq.s32.totalorder %v193, 2
  %v199 = vxor.u32 %v190, 2147483648
  %v200 = vsel %vm198, %v199, %v191
  %v201 = vsel %vm194, %v197, %v200
  %v202 = vsel %vm192, nan, %v201
  %v203 = vand.u32 2147483647, %v99
  %vm204 = vcmp.le.f32.partialorder %v203, 0.7853982
  %vm205 = vcmp.lt.s32.totalorder %v99, 0
  %v206 = vand.u32 %v99, 2139095040
  %v207 = vshrl.u32 %v206, 23
  %v208 = vsub.s32 %v207, 127
  %v209 = vand.u32 2147483647, %v99
  %v210 = vand.u32 %v209, 8388607
  %v211 = vor.u32 %v210, 8388608
  %v212 = vsub.s32 0, %v211
  %v213 = vadd.s32 %v208, 1
  %vm214 = vcmp.gt.s32.totalorder %v213, 0
  %v215 = vsel %vm214, %v213, 0
  %v216 = vshrl.u32 %v215, 5
  %v217 = vand.u32 %v215, 31
  %v218 = vsub.s32 32, %v217
  %v219 = vshrl.u32 683565275, %v218
  %v220 = vshll.u32 683565275, %v217
  %v221 = vshrl.u32 2475754826, %v218
  %v222 = vor.u32 %v220, %v221
  %v223 = vshll.u32 2475754826, %v217
  %v224 = vshrl.u32 2131351028, %v218
  %v225 = vor.u32 %v223, %v224
  %v226 = vshll.u32 2131351028, %v217
  %v227 = vshrl.u32 2102212464, %v218
  %v228 = vor.u32 %v226, %v227
  %v229 = vshll.u32 2102212464, %v217
  %v230 = vshrl.u32 920167782, %v218
  %v231 = vor.u32 %v229, %v230
  %v232 = vshll.u32 920167782, %v217
  %v233 = vshrl.u32 1326507024, %v218
  %v234 = vor.u32 %v232, %v233
  %vm235 = vcmp.lt.s32.totalorder %v216, 1
  %vm236 = vcmp.lt.s32.totalorder %v216, 2
  %vm237 = vcmp.lt.s32.totalorder %v216, 3
  %vm238 = vcmp.lt.s32.totalorder %v216, 4
  %v239 = vsel %vm235, %v219, %v222
  %v240 = vsel %vm238, %v228, 2102212464
  %v241 = vsel %vm237, %v225, %v240
  %v242 = vsel %vm236, %v239, %v241
  %v243 = vsel %vm235, %v222, %v225
  %v244 = vsel %vm238, %v231, 920167782
  %v245 = vsel %vm237, %v228, %v244
  %v246 = vsel %vm236, %v243, %v245
  %v247 = vsel %vm235, %v225, %v228
  %v248 = vsel %vm238, %v234, 1326507024
  %v249 = vsel %vm237, %v231, %v248
  %v250 = vsel %vm236, %v247, %v249
  %v251 = vshll.u32 %v211, 8
  %v252 = vmul.u32.u64.compose %v251, %v250
  %v253 = vextract.low.u32 %v252
  %v254 = vextract.high.u32 %v252
  %v255 = vmul.u32.u64.compose %v251, %v246
  %v256 = vextract.low.u32 %v255
  %v257 = vextract.high.u32 %v255
  %v258 = vmul.u32 %v251, %v242
  %v259 = vadd.s32 %v254, %v256
  %vm260 = vc.u32 %v254, %v256
  %v261 = vadd.s32 %v257, 1
  %v262 = vsel %vm260, %v261, %v257
  %v263 = vadd.s32 %v258, %v262
  %v264 = vadd.s32 %v263, 536870912
  %v265 = vshrl.u32 %v264, 30
  %v266 = vshll.u32 %v265, 30
  %v267 = vsub.s32 %v263, %v266
  %vm268 = vcmp.lt.s32.totalorder %v267, 0
  %v269 = vsub.s32 0, %v267
  %v270 = vsel %vm268, %v269, %v267
  %v271 = vclz %v270
  %v272 = vsub.s32 %v271, 2
  %vm273 = vcmp.gt.s32.totalorder 0, %v272
  %v274 = vsel %vm273, 0, %v272
  %v275 = vsub.s32 32, %v274
  %v276 = vshll.u32 %v267, %v274
  %v277 = vshrl.u32 %v259, %v275
  %v278 = vor.u32 %v276, %v277
  %v279 = vsub.s32 4294967266, %v274
  %v280 = vadd.s32 %v279, 127
  %v281 = vshll.u32 %v280, 23
  %v282 = vor.u32 4788187, %v281
  %v283 = vand.u32 2147483647, %v282
  %v285 = vcvt.s32.f32 %v278
  %v286 = vmul.f32 %v285, %v283
  %v287 = vxor.u32 %v286, 2147483648
  %v288 = vsel %vm205, %v287, %v286
  %v289 = vsub.s32 4, %v265
  %v290 = vsel %vm205, %v289, %v265
  %v291 = vsel %vm204, %v99, %v288
  %v292 = vsel %vm204, 0, %v290
  %v293 = vcosq.f32.pop %v291
  %v294 = vsinq.f32.pop %v291
  %vm295 = vweird.f32 %v99
  %v296 = vand.u32 %v292, 3
  %vm297 = vcmp.lt.s32.totalorder %v296, 2
  %vm298 = vcmp.eq.s32.totalorder %v296, 0
  %v299 = vxor.u32 %v294, 2147483648
  %v300 = vsel %vm298, %v293, %v299
  %vm301 = vcmp.eq.s32.totalorder %v296, 2
  %v302 = vxor.u32 %v293, 2147483648
  %v303 = vsel %vm301, %v302, %v294
  %v304 = vsel %vm297, %v300, %v303
  %v305 = vsel %vm295, nan, %v304
  %v306 = vmul.f32 %v90, %v202
  %v307 = vmul.f32 %v97, %v305
  %308 = vst [vmem:[%s1] sm:$0xff] %v306
  %309 = vst [vmem:[%s1 + $0x8] sm:$0xff] %v307
  // Predicated region
  $region6: #{_draw_standard_normal.1} parent=0 // pred_check
    _
  $region7: #{_draw_standard_normal.1} parent=0 // pred_check_branch
    %311 = sbr.rel (0) target = $region9
  $region8: #{_draw_standard_normal.1} parent=0 // pred_region
    _
  $region9: #{_draw_standard_normal.1} parent=0 // pred_fallthru
    _
  // Predicated region
  $region10: #{_draw_standard_normal.1} parent=0 // pred_check
    _
  $region11: #{_draw_standard_normal.1} parent=0 // pred_check_branch
    %313 = sbr.rel (0) target = $region13
  $region12: #{_draw_standard_normal.1} parent=0 // pred_region
    _
  $region13: #{_draw_standard_normal.1} parent=0 // pred_fallthru
    _

</llo_original>
